<compile_context>
chip_gen: v7x
topology: tpu7x:2x2x1
jax: 0.10.0
libtpu: 0.0.40
codegen_flags: <defaults>
</compile_context>

<pallas_src>
import jax
import jax.numpy as jnp
from jax.experimental import pallas as pl
from jax.experimental.pallas import tpu as pltpu


def _round_up(x, m):
    return ((x + m - 1) // m) * m


# --------------------- fused caption-loss Pallas kernel ----------------------
# Per row-tile:  logits = x @ W            (MXU, bf16 in / f32 acc)
#                logp   = log_softmax(logits)             (row-wise)
#                acc   += -logp[row, target[row]] * mask[row],  sum(mask)
# num/den accumulate in SMEM across the (sequential) row-tile grid.

def _fused_caption_nll_kernel(x_ref, w_ref, tgt_ref, msk_ref,
                              num_ref, den_ref, acc_ref):
    step = pl.program_id(0)

    @pl.when(step == 0)
    def _init():
        acc_ref[0] = jnp.float32(0.0)
        acc_ref[1] = jnp.float32(0.0)

    # MXU matmul: bf16 inputs, f32 accumulation.
    logits = jnp.dot(x_ref[...], w_ref[...],
                     preferred_element_type=jnp.float32)        # (TN, V) f32
    m = jnp.max(logits, axis=-1, keepdims=True)
    z = logits - m
    lse = jnp.log(jnp.sum(jnp.exp(z), axis=-1, keepdims=True))  # (TN, 1)

    # Gather logp[row, target[row]] via iota/one-hot compare (no HBM gather).
    # TODO(synk): at production vocab (V ~ 10k) reduce over V in 128-lane
    # chunks (lax.fori_loop, unroll=True) instead of one (TN, V) one-hot.
    ids = jax.lax.broadcasted_iota(jnp.int32, logits.shape, 1)
    onehot = (ids == tgt_ref[...]).astype(jnp.float32)          # (TN, V)
    picked = jnp.sum(z * onehot, axis=-1, keepdims=True) - lse  # logp[target]

    msk = msk_ref[...]                                          # (TN, 1)
    acc_ref[0] += -jnp.sum(picked * msk)
    acc_ref[1] += jnp.sum(msk)

    @pl.when(step == pl.num_programs(0) - 1)
    def _finalize():
        num_ref[0, 0] = acc_ref[0]
        den_ref[0, 0] = acc_ref[1]


def caption_nll_loss(h_flat, w_vocab, target, mask, tile_n=128):
    """LanguageModelCriterion fused with the vocab projection.

    h_flat: (N, H) f32, w_vocab: (H, V) f32, target: (N,) int, mask: (N,) float
    -> scalar f32 loss = -sum(logp[target]*mask) / sum(mask).
    """
    N, H = h_flat.shape
    V = w_vocab.shape[1]

    # Row tile: large enough to pipeline, small enough that the bf16 x tile,
    # the resident bf16 W and the f32 (tile_n, V) logits fit comfortably in
    # scoped VMEM even on v7x (64 MiB total / 32 MiB scoped).
    tile_n = min(tile_n, _round_up(N, 16))
    n_pad = _round_up(N, tile_n)
    pad = n_pad - N
    if pad:
        h_flat = jnp.pad(h_flat, ((0, pad), (0, 0)))
        target = jnp.pad(target, (0, pad))
        mask = jnp.pad(mask, (0, pad))     # pad rows have mask 0 -> no effect

    x = h_flat.astype(jnp.bfloat16)        # halve DMA bytes, feed the MXU bf16
    w = w_vocab.astype(jnp.bfloat16)
    tgt = target.reshape(n_pad, 1).astype(jnp.int32)
    msk = mask.reshape(n_pad, 1).astype(jnp.float32)

    num_tiles = n_pad // tile_n
    num, den = pl.pallas_call(
        _fused_caption_nll_kernel,
        out_shape=(jax.ShapeDtypeStruct((1, 1), jnp.float32),
                   jax.ShapeDtypeStruct((1, 1), jnp.float32)),
        grid=(num_tiles,),
        in_specs=[pl.BlockSpec((tile_n, H), lambda i: (i, 0)),
                  pl.BlockSpec((H, V), lambda i: (0, 0)),       # W resident
                  pl.BlockSpec((tile_n, 1), lambda i: (i, 0)),
                  pl.BlockSpec((tile_n, 1), lambda i: (i, 0))],
        out_specs=(pl.BlockSpec((1, 1), lambda i: (0, 0),
                                memory_space=pltpu.MemorySpace.SMEM),
                   pl.BlockSpec((1, 1), lambda i: (0, 0),
                                memory_space=pltpu.MemorySpace.SMEM)),
        scratch_shapes=[pltpu.SMEM((2,), jnp.float32)],
        compiler_params=pltpu.CompilerParams(
            dimension_semantics=("arbitrary",)),   # reduction over row tiles
    )(x, w, tgt, msk)

    # PyTorch divides by sum(mask) unguarded; clamp only to avoid NaN on a
    # fully-padded batch (identical whenever any mask entry is non-zero).
    return num[0, 0] / jnp.maximum(den[0, 0], 1e-6)


# ----------------------------- synthetic model -------------------------------

def init_params(key, V, H, D_tr):
    k1, k2, k3, k4, k5 = jax.random.split(key, 5)
    return {
        "emb":     0.02 * jax.random.normal(k1, (V, H), jnp.float32),
        "w_tr_in": 0.02 * jax.random.normal(k2, (D_tr, H), jnp.float32),
        "w_vocab": 0.02 * jax.random.normal(k3, (H, V), jnp.float32),
        "w_trace": 0.02 * jax.random.normal(k4, (H, D_tr), jnp.float32),
        "b_trace": 0.01 * jax.random.normal(k5, (D_tr,), jnp.float32),
    }


def _model_hidden(params, fc_feats, att_feats, trace_feats, box_feats, labels,
                  att_masks, cur_masks):
    """Shared deterministic synthetic encoder -> (B, T, H) hidden states."""
    emb = params["emb"][labels]                                       # (B,T,H)
    att_ctx = (att_feats * att_masks[..., None]).sum(1) / \
              jnp.maximum(att_masks.sum(1, keepdims=True), 1.0)       # (B,H)
    box_ctx = (box_feats @ params["w_tr_in"]).mean(1)                 # (B,H)
    tr = trace_feats @ params["w_tr_in"]                              # (B,Tt,H)
    tr_ctx = (tr * cur_masks[..., None]).sum(1) / \
             jnp.maximum(cur_masks.sum(1, keepdims=True), 1.0)        # (B,H)
    return emb + (fc_feats + att_ctx + box_ctx + tr_ctx)[:, None, :]  # (B,T,H)


def model_trace(params, *args):
    """self.model(..., task='both') when only the trace head matters.
    (The caption head output is discarded inside the no_grad loop, so the
    Pallas projection is skipped entirely here.)"""
    h = _model_hidden(params, *args)
    return h @ params["w_trace"] + params["b_trace"]                  # (B,T,5)


# ---------------------------- LossWrapper.forward -----------------------------

def loss_wrapper_forward(params, fc_feats, att_feats, trace_feats, box_feats,
                         labels, masks, att_masks, trace_masks,
                         show_labels, show_trace_feats, show_trace_masks,
                         show_masks, show_gate_labels, gts, gt_indices,
                         sc_flag, struc_flag):
    if struc_flag or sc_flag:
        # TODO(synk): struc_flag / sc_flag branches require model sampling
        # (beam search) + self-critical CIDEr reward; no Pallas equivalent.
        raise NotImplementedError(
            "only the coco-caption (not sc / not struc) branch is implemented")

    out = {}
    B = fc_feats.shape[0]
    T = show_labels.shape[2]
    H = fc_feats.shape[-1]
    D_tr = show_trace_feats.shape[-1]
    cap_labels = show_labels[:, 0, :-1]                    # (B, T-1)

    # --- autoregressive trace construction (the torch.no_grad block) ---
    # Fixed-shape trace buffer (length T-2, the max actually used) + a length
    # mask reproduce the growing cat([...]) exactly for the masked-mean model,
    # while keeping every loop iteration the same shape (single compile).
    L = T - 2
    trace_buf = jnp.zeros((B, L, D_tr), jnp.float32).at[:, 0].set(
        show_trace_feats[:, 0])
    base_mask = show_masks[:, 0, :L]                       # (B, L)
    for i in range(T - 2):
        tlen = (1 if i == 0 else i) + 1                    # len(tmp_trace)+1
        cur_mask = base_mask * (jnp.arange(L) < tlen)[None, :].astype(
            base_mask.dtype)
        trace_out = model_trace(params, fc_feats, att_feats, trace_buf,
                                box_feats, cap_labels, att_masks, cur_mask)
        curr = trace_out[:, i]                             # (B, D_tr)
        curr = curr.at[:, 4].set((curr[:, 2] - curr[:, 0]) *
                                 (curr[:, 3] - curr[:, 1]))
        if i == 0:
            trace_buf = jnp.zeros_like(trace_buf).at[:, 0].set(curr)
        else:
            trace_buf = trace_buf.at[:, i].set(curr)
    coco_trace_outputs = jax.lax.stop_gradient(trace_buf)  # .detach(), (B,T-2,5)

    # --- final 'both' pass: hidden states, then fused Pallas caption loss ---
    cur_mask = show_masks[:, 0, :L]
    h = _model_hidden(params, fc_feats, att_feats, coco_trace_outputs,
                      box_feats, cap_labels, att_masks, cur_mask)     # (B,T-1,H)

    # crit_caption (LanguageModelCriterion, label_smoothing == 0), fused:
    tgt = show_labels[:, 0, 1:]                            # (B, T-1)
    msk = show_masks[:, 0, 1:]                             # (B, T-1)
    N = B * (T - 1)
    loss_coco_caption = caption_nll_loss(
        h.reshape(N, H), params["w_vocab"],
        tgt.reshape(N), msk.reshape(N))

    out["loss"] = loss_coco_caption
    return out


# ------------------------------------ main ------------------------------------

if __name__ == "__main__":
    B, T, V, H, A, D_tr = 2, 8, 256, 128, 4, 5
    key = jax.random.PRNGKey(0)
    ks = jax.random.split(key, 10)
    params = init_params(ks[0], V, H, D_tr)

    fc_feats = jax.random.normal(ks[1], (B, H), jnp.float32)
    att_feats = jax.random.normal(ks[2], (B, A, H), jnp.float32)
    trace_feats = jax.random.uniform(ks[3], (B, T, D_tr), jnp.float32)  # unused here
    box_feats = jax.random.uniform(ks[4], (B, A, D_tr), jnp.float32)
    labels = jax.random.randint(ks[5], (B, 1, T), 1, V)                 # unused here
    masks = jnp.ones((B, 1, T), jnp.float32)
    att_masks = jnp.ones((B, A), jnp.float32)
    trace_masks = jnp.ones((B, T), jnp.float32)
    show_labels = jax.random.randint(ks[6], (B, 1, T), 1, V)
    show_trace_feats = jax.random.uniform(ks[7], (B, T, D_tr), jnp.float32)
    show_trace_masks = jnp.ones((B, T), jnp.float32)
    show_masks = jnp.ones((B, 1, T), jnp.float32)
    show_gate_labels = jnp.zeros((B,), jnp.int32)
    gts = None
    gt_indices = jnp.arange(B)

    forward = jax.jit(loss_wrapper_forward,
                      static_argnames=("sc_flag", "struc_flag"))
    out = forward(params, fc_feats, att_feats, trace_feats, box_feats,
                  labels, masks, att_masks, trace_masks, show_labels,
                  show_trace_feats, show_trace_masks, show_masks,
                  show_gate_labels, gts, gt_indices,
                  sc_flag=False, struc_flag=False)
    jax.block_until_ready(out["loss"])
    assert out["loss"].shape == () and jnp.isfinite(out["loss"])
    print("KERNEL_OK")
</pallas_src>

<mosaic_0001>
module attributes {stable_mosaic.version = 11 : i64} {
  func.func @_fused_caption_nll_kernel(%arg0: i32, %arg1: memref<16x128xbf16, #tpu.memory_space<vmem>>, %arg2: memref<128x256xbf16, #tpu.memory_space<vmem>>, %arg3: memref<16x1xi32, #tpu.memory_space<vmem>>, %arg4: memref<16x1xf32, #tpu.memory_space<vmem>>, %arg5: memref<1x1xf32, #tpu.memory_space<smem>>, %arg6: memref<1x1xf32, #tpu.memory_space<smem>>, %arg7: memref<2xf32, #tpu.memory_space<smem>>) attributes {dimension_semantics = [#tpu.dimension_semantics<arbitrary>], iteration_bounds = array<i64: 1>, scalar_prefetch = 0 : i64, scratch_operands = 1 : i64, tpu.core_type = #tpu.core_type<tc>, window_params = [{transform_indices = @transform_0, window_bounds = array<i64: 16, 128>}, {pipeline_mode = #tpu.pipeline_mode<synchronous>, transform_indices = @transform_1, window_bounds = array<i64: 128, 256>}, {transform_indices = @transform_2, window_bounds = array<i64: 16, 1>}, {transform_indices = @transform_3, window_bounds = array<i64: 16, 1>}, {transform_indices = @transform_4, window_bounds = array<i64: 1, 1>}, {transform_indices = @transform_5, window_bounds = array<i64: 1, 1>}]} {
    %c0_i32 = arith.constant 0 : i32
    %0 = arith.cmpi eq, %arg0, %c0_i32 : i32
    %1 = arith.extui %0 : i1 to i32
    %c0_i32_0 = arith.constant 0 : i32
    %2 = arith.cmpi ne, %1, %c0_i32_0 : i32
    scf.if %2 {
      %cst_19 = arith.constant 0.000000e+00 : f32
      %c0_20 = arith.constant 0 : index
      %44 = memref.load %arg7[%c0_20] : memref<2xf32, #tpu.memory_space<smem>>
      memref.store %cst_19, %arg7[%c0_20] : memref<2xf32, #tpu.memory_space<smem>>
      %cst_21 = arith.constant 0.000000e+00 : f32
      %c1_22 = arith.constant 1 : index
      %45 = memref.load %arg7[%c1_22] : memref<2xf32, #tpu.memory_space<smem>>
      memref.store %cst_21, %arg7[%c1_22] : memref<2xf32, #tpu.memory_space<smem>>
    } else {
    }
    %c0 = arith.constant 0 : index
    %c0_1 = arith.constant 0 : index
    %3 = vector.load %arg1[%c0, %c0_1] : memref<16x128xbf16, #tpu.memory_space<vmem>>, vector<16x128xbf16>
    %c0_2 = arith.constant 0 : index
    %c0_3 = arith.constant 0 : index
    %4 = vector.load %arg2[%c0_2, %c0_3] : memref<128x256xbf16, #tpu.memory_space<vmem>>, vector<128x256xbf16>
    %cst = arith.constant dense<0.000000e+00> : vector<16x256xf32>
    %5 = tpu.matmul %3, %4, %cst {dimension_numbers = #tpu.dot_dimension_numbers<[1], [0], [0], [1], [0, 0, 1, 1], [], []>} : vector<16x128xbf16>, vector<128x256xbf16>, vector<16x256xf32> -> vector<16x256xf32>
    %cst_4 = arith.constant dense<0xFF800000> : vector<16xf32>
    %6 = vector.multi_reduction <maximumf>, %5, %cst_4 [1] : vector<16x256xf32> to vector<16xf32>
    %7 = vector.shape_cast %6 : vector<16xf32> to vector<16x1xf32>
    %8 = vector.broadcast %7 : vector<16x1xf32> to vector<16x256xf32>
    %9 = arith.subf %5, %8 : vector<16x256xf32>
    %10 = math.exp %9 : vector<16x256xf32>
    %cst_5 = arith.constant dense<0.000000e+00> : vector<16xf32>
    %11 = vector.multi_reduction <add>, %10, %cst_5 [1] : vector<16x256xf32> to vector<16xf32>
    %12 = vector.shape_cast %11 : vector<16xf32> to vector<16x1xf32>
    %13 = math.log %12 : vector<16x1xf32>
    %14 = tpu.iota {dimensions = array<i32: 1>} : vector<16x256xi32>
    %c0_6 = arith.constant 0 : index
    %c0_7 = arith.constant 0 : index
    %15 = vector.load %arg3[%c0_6, %c0_7] : memref<16x1xi32, #tpu.memory_space<vmem>>, vector<16x1xi32>
    %16 = vector.broadcast %15 : vector<16x1xi32> to vector<16x256xi32>
    %17 = arith.cmpi eq, %14, %16 : vector<16x256xi32>
    %18 = arith.extui %17 : vector<16x256xi1> to vector<16x256xi32>
    %19 = arith.sitofp %18 : vector<16x256xi32> to vector<16x256xf32>
    %20 = arith.mulf %9, %19 : vector<16x256xf32>
    %cst_8 = arith.constant dense<0.000000e+00> : vector<16xf32>
    %21 = vector.multi_reduction <add>, %20, %cst_8 [1] : vector<16x256xf32> to vector<16xf32>
    %22 = vector.shape_cast %21 : vector<16xf32> to vector<16x1xf32>
    %23 = arith.subf %22, %13 : vector<16x1xf32>
    %c0_9 = arith.constant 0 : index
    %c0_10 = arith.constant 0 : index
    %24 = vector.load %arg4[%c0_9, %c0_10] : memref<16x1xf32, #tpu.memory_space<vmem>>, vector<16x1xf32>
    %c0_11 = arith.constant 0 : index
    %25 = memref.load %arg7[%c0_11] : memref<2xf32, #tpu.memory_space<smem>>
    %26 = arith.mulf %23, %24 : vector<16x1xf32>
    %27 = vector.shape_cast %26 : vector<16x1xf32> to vector<1x16x1xf32>
    %cst_12 = arith.constant dense<0.000000e+00> : vector<1xf32>
    %28 = vector.multi_reduction <add>, %27, %cst_12 [1, 2] : vector<1x16x1xf32> to vector<1xf32>
    %29 = vector.shape_cast %28 : vector<1xf32> to vector<1x1x1xf32>
    %30 = vector.extract %29[0, 0, 0] : f32 from vector<1x1x1xf32>
    %cst_13 = arith.constant 0.000000e+00 : f32
    %31 = arith.subf %cst_13, %30 : f32
    %32 = arith.addf %25, %31 : f32
    %c0_14 = arith.constant 0 : index
    %33 = memref.load %arg7[%c0_14] : memref<2xf32, #tpu.memory_space<smem>>
    memref.store %32, %arg7[%c0_14] : memref<2xf32, #tpu.memory_space<smem>>
    %c1 = arith.constant 1 : index
    %34 = memref.load %arg7[%c1] : memref<2xf32, #tpu.memory_space<smem>>
    %35 = vector.shape_cast %24 : vector<16x1xf32> to vector<1x16x1xf32>
    %cst_15 = arith.constant dense<0.000000e+00> : vector<1xf32>
    %36 = vector.multi_reduction <add>, %35, %cst_15 [1, 2] : vector<1x16x1xf32> to vector<1xf32>
    %37 = vector.shape_cast %36 : vector<1xf32> to vector<1x1x1xf32>
    %38 = vector.extract %37[0, 0, 0] : f32 from vector<1x1x1xf32>
    %39 = arith.addf %34, %38 : f32
    %c1_16 = arith.constant 1 : index
    %40 = memref.load %arg7[%c1_16] : memref<2xf32, #tpu.memory_space<smem>>
    memref.store %39, %arg7[%c1_16] : memref<2xf32, #tpu.memory_space<smem>>
    %c0_i32_17 = arith.constant 0 : i32
    %41 = arith.cmpi eq, %arg0, %c0_i32_17 : i32
    %42 = arith.extui %41 : i1 to i32
    %c0_i32_18 = arith.constant 0 : i32
    %43 = arith.cmpi ne, %42, %c0_i32_18 : i32
    scf.if %43 {
      %c0_19 = arith.constant 0 : index
      %44 = memref.load %arg7[%c0_19] : memref<2xf32, #tpu.memory_space<smem>>
      %c0_20 = arith.constant 0 : index
      %c0_21 = arith.constant 0 : index
      %45 = memref.load %arg5[%c0_20, %c0_21] : memref<1x1xf32, #tpu.memory_space<smem>>
      memref.store %44, %arg5[%c0_20, %c0_21] : memref<1x1xf32, #tpu.memory_space<smem>>
      %c1_22 = arith.constant 1 : index
      %46 = memref.load %arg7[%c1_22] : memref<2xf32, #tpu.memory_space<smem>>
      %c0_23 = arith.constant 0 : index
      %c0_24 = arith.constant 0 : index
      %47 = memref.load %arg6[%c0_23, %c0_24] : memref<1x1xf32, #tpu.memory_space<smem>>
      memref.store %46, %arg6[%c0_23, %c0_24] : memref<1x1xf32, #tpu.memory_space<smem>>
    } else {
    }
    return
  }
  func.func @transform_0(%arg0: i32) -> (i32, i32) {
    %c0_i32 = arith.constant 0 : i32
    %c0_i32_0 = arith.constant 0 : i32
    return %arg0, %c0_i32 : i32, i32
  }
  func.func @transform_1(%arg0: i32) -> (i32, i32) {
    %c0_i32 = arith.constant 0 : i32
    %c0_i32_0 = arith.constant 0 : i32
    %c0_i32_1 = arith.constant 0 : i32
    return %c0_i32, %c0_i32_0 : i32, i32
  }
  func.func @transform_2(%arg0: i32) -> (i32, i32) {
    %c0_i32 = arith.constant 0 : i32
    %c0_i32_0 = arith.constant 0 : i32
    return %arg0, %c0_i32 : i32, i32
  }
  func.func @transform_3(%arg0: i32) -> (i32, i32) {
    %c0_i32 = arith.constant 0 : i32
    %c0_i32_0 = arith.constant 0 : i32
    return %arg0, %c0_i32 : i32, i32
  }
  func.func @transform_4(%arg0: i32) -> (i32, i32) {
    %c0_i32 = arith.constant 0 : i32
    %c0_i32_0 = arith.constant 0 : i32
    %c0_i32_1 = arith.constant 0 : i32
    return %c0_i32, %c0_i32_0 : i32, i32
  }
  func.func @transform_5(%arg0: i32) -> (i32, i32) {
    %c0_i32 = arith.constant 0 : i32
    %c0_i32_0 = arith.constant 0 : i32
    %c0_i32_1 = arith.constant 0 : i32
    return %c0_i32, %c0_i32_0 : i32, i32
  }
}

</mosaic_0001>

<llo_original>
// kernel: squeeze.75
$region0: #{squeeze.75}
  %s0 = inlined_call_operand.vmem [shape: f32[2,7], index: 0, kind: input, shape index: {}]
  %s1 = inlined_call_operand.vmem [shape: f32[14], index: 1, kind: output, shape index: {}]
  $region1: #{squeeze.75} parent=0
    #allocation0 [shape = 'u8[4096]{0}', space=vmem, size = 0x1000, scoped, tag = 'scoped mem for output reshape']
    #allocation1 [shape = 'u8[4096]{0}', space=vmem, size = 0x1000, scoped, tag = 'scoped mem for input reshape']
    %s3 = sshllo.u32 0, 2
    %v4 = vld [vmem:[%s0] sm:%s3]
    %5 = vst [vmem:[#allocation1] sm:%s3] %v4
    %v6 = vld [vmem:[#allocation1] sm:$0x1]
    %vm7 = vcmask 56320
    %8 = vst.msk [vmem:[#allocation0] sm:$0x1] %vm7, %v6
    %s9 = scalar_lea.vmem [#allocation1], 1
    %v10 = vld [vmem:[%s9] sm:$0x1]
    %11 = vrot.lane.b32.xlu0 %v10, 7
    %v12 = vpop.permute.xlu0 %11
    %vm13 = vcmask 113720
    %14 = vst.msk [vmem:[#allocation0] sm:$0x1] %vm13, %v12
    %s16 = sshllo.u32 0, 1
    %v18 = vld [vmem:[#allocation0] sm:%s16]
    %s19 = sshllo.u32 0, 1
    %20 = vst [vmem:[%s1] sm:%s19] %v18

// kernel: squeeze.74
$region0: #{squeeze.74}
  %s0 = inlined_call_operand.vmem [shape: s32[2,7], index: 0, kind: input, shape index: {}]
  %s1 = inlined_call_operand.vmem [shape: s32[14], index: 1, kind: output, shape index: {}]
  $region1: #{squeeze.74} parent=0
    #allocation0 [shape = 'u8[4096]{0}', space=vmem, size = 0x1000, scoped, tag = 'scoped mem for output reshape']
    #allocation1 [shape = 'u8[4096]{0}', space=vmem, size = 0x1000, scoped, tag = 'scoped mem for input reshape']
    %s3 = sshllo.u32 0, 2
    %v4 = vld [vmem:[%s0] sm:%s3]
    %5 = vst [vmem:[#allocation1] sm:%s3] %v4
    %v6 = vld [vmem:[#allocation1] sm:$0x1]
    %vm7 = vcmask 56320
    %8 = vst.msk [vmem:[#allocation0] sm:$0x1] %vm7, %v6
    %s9 = scalar_lea.vmem [#allocation1], 1
    %v10 = vld [vmem:[%s9] sm:$0x1]
    %11 = vrot.lane.b32.xlu0 %v10, 7
    %v12 = vpop.permute.xlu0 %11
    %vm13 = vcmask 113720
    %14 = vst.msk [vmem:[#allocation0] sm:$0x1] %vm13, %v12
    %s16 = sshllo.u32 0, 1
    %v18 = vld [vmem:[#allocation0] sm:%s16]
    %s19 = sshllo.u32 0, 1
    %20 = vst [vmem:[%s1] sm:%s19] %v18

// kernel: loss_wrapper_forward.1
$region0: #{loss_wrapper_forward.1}
  #allocation0 [shape = 'u32[]', space=smem, size = 0x4, offset = 0x4, fixed_abs, tag = 'smem constant byte address 0x4 - core index']
  #allocation1 [shape = 'u32[144,128]{1,0:T(1,128)}', space=vmem, size = 0x12000, scoped, tag = 'internal scratch']
  #allocation2 [shape = 'f32[2]{0:T(128)}', space=smem, size = 0x200, scoped, tag = 'scratch operand']
  %s0 = inlined_call_operand.vmem [shape: bf16[16,128], index: 0, kind: input, shape index: {}]
  %s1 = inlined_call_operand.vmem [shape: bf16[128,256], index: 1, kind: input, shape index: {}]
  %s2 = inlined_call_operand.vmem [shape: s32[16,1], index: 2, kind: input, shape index: {}]
  %s3 = inlined_call_operand.vmem [shape: f32[16,1], index: 3, kind: input, shape index: {}]
  %s4 = inlined_call_operand.hbm [shape: f32[1,1], index: 4, kind: output, shape index: {0}]
  %s5 = inlined_call_operand.hbm [shape: f32[1,1], index: 5, kind: output, shape index: {1}]
  %6 = xla_tuple %s4, %s5
  %s7 = sld [smem:[#allocation0]]
  $region42: #{loss_wrapper_forward.1} parent=0
    _
  %s9 = ssub.s32 1, %s7
  %s10 = scalar_select 0, %s9, %s7
  $region1: #{loss_wrapper_forward.1} parent=0
    #allocation3 [shape = 'u8[512]{0}', space=smem, size = 0x200, scoped, tag = 'output window, operand 0, single buffered']
    #allocation4 [shape = 's32[1]{0}', space=sflag, size = 0x4, scoped, tag = 'scoped memory for loss_wrapper_forward.1']
    #allocation5 [shape = 'u8[512]{0}', space=smem, size = 0x200, scoped, tag = 'output window, operand 1, single buffered']
    #allocation6 [shape = 's32[1]{0}', space=sflag, size = 0x4, scoped, tag = 'scoped memory for loss_wrapper_forward.1']
    %11 = vsyncpa [#allocation4], 0
    %12 = vsyncpa [#allocation6], 0
    // Predicated region
    $region2: #{loss_wrapper_forward.1} parent=1 // pred_check
      _
    $region3: #{loss_wrapper_forward.1} parent=1 // pred_check_branch
      %14 = sbr.rel (0) target = $region5
    $region4: #{loss_wrapper_forward.1} parent=1 // pred_region
      _
    $region5: #{loss_wrapper_forward.1} parent=1 // pred_fallthru
      _
    // Predicated region
    $region6: #{loss_wrapper_forward.1} parent=1 // pred_check
      _
    $region7: #{loss_wrapper_forward.1} parent=1 // pred_check_branch
      %16 = sbr.rel (0) target = $region9
    $region8: #{loss_wrapper_forward.1} parent=1 // pred_region
      _
    $region9: #{loss_wrapper_forward.1} parent=1 // pred_fallthru
      _
    // Predicated region
    $region10: #{loss_wrapper_forward.1} parent=1 // pred_check
      _
    $region11: #{loss_wrapper_forward.1} parent=1 // pred_check_branch
      %18 = sbr.rel (0) target = $region13
    $region12: #{loss_wrapper_forward.1} parent=1 // pred_region
      _
    $region13: #{loss_wrapper_forward.1} parent=1 // pred_fallthru
      _
    // Predicated region
    $region14: #{loss_wrapper_forward.1} parent=1 // pred_check
      _
    $region15: #{loss_wrapper_forward.1} parent=1 // pred_check_branch
      %20 = sbr.rel (0) target = $region17
    $region16: #{loss_wrapper_forward.1} parent=1 // pred_region
      _
    $region17: #{loss_wrapper_forward.1} parent=1 // pred_fallthru
      _
    %p22 = scmp.eq.s32.totalorder 0, 0
    // Predicated region
    $region18: #{loss_wrapper_forward.1} parent=1 // pred_check
      %p23 = pneg %p22
    $region19: #{loss_wrapper_forward.1} parent=1 // pred_check_branch
      %25 = sbr.rel (%p23) target = $region21
    $region20: #{loss_wrapper_forward.1} parent=1 // pred_region
      %s26 = scalar_lea.smem [#allocation2], 0
      %27 = sst [smem:[%s26]] 0.0
      %s28 = scalar_lea.smem [#allocation2], 1
      %29 = sst [smem:[%s28]] 0.0
    $region21: #{loss_wrapper_forward.1} parent=1 // pred_fallthru
      _
    %v30 = vld [vmem:[%s0] sm:$0xf]
    %v31 = vld [vmem:[%s0 + $0x4] sm:$0xf]
    %v32 = vld [vmem:[%s1] sm:$0xff]
    %v33 = vld [vmem:[%s1 + $0x8] sm:$0xff]
    %v34 = vld [vmem:[%s1 + $0x10] sm:$0xff]
    %v35 = vld [vmem:[%s1 + $0x18] sm:$0xff]
    %v36 = vld [vmem:[%s1 + $0x20] sm:$0xff]
    %v37 = vld [vmem:[%s1 + $0x28] sm:$0xff]
    %v38 = vld [vmem:[%s1 + $0x30] sm:$0xff]
    %v39 = vld [vmem:[%s1 + $0x38] sm:$0xff]
    %v40 = vld [vmem:[%s1 + $0x40] sm:$0xff]
    %v41 = vld [vmem:[%s1 + $0x48] sm:$0xff]
    %v42 = vld [vmem:[%s1 + $0x50] sm:$0xff]
    %v43 = vld [vmem:[%s1 + $0x58] sm:$0xff]
    %v44 = vld [vmem:[%s1 + $0x60] sm:$0xff]
    %v45 = vld [vmem:[%s1 + $0x68] sm:$0xff]
    %v46 = vld [vmem:[%s1 + $0x70] sm:$0xff]
    %v47 = vld [vmem:[%s1 + $0x78] sm:$0xff]
    %v50 = vunpack.c.l.b16 %v30
    %v51 = vunpack.c.l.b16 %v31
    %v52 = vpack.c.b16 %v51, %v50
    %v70 = vunpack.c.l.b16 %v32
    %v71 = vunpack.c.h.b16 %v32
    %v72 = vunpack.c.l.b16 %v33
    %v73 = vunpack.c.h.b16 %v33
    %v74 = vunpack.c.l.b16 %v34
    %v75 = vunpack.c.h.b16 %v34
    %v76 = vunpack.c.l.b16 %v35
    %v77 = vunpack.c.h.b16 %v35
    %v78 = vunpack.c.l.b16 %v36
    %v79 = vunpack.c.h.b16 %v36
    %v80 = vunpack.c.l.b16 %v37
    %v81 = vunpack.c.h.b16 %v37
    %v82 = vunpack.c.l.b16 %v38
    %v83 = vunpack.c.h.b16 %v38
    %v84 = vunpack.c.l.b16 %v39
    %v85 = vunpack.c.h.b16 %v39
    %v86 = vunpack.c.l.b16 %v40
    %v87 = vunpack.c.h.b16 %v40
    %v88 = vunpack.c.l.b16 %v41
    %v89 = vunpack.c.h.b16 %v41
    %v90 = vunpack.c.l.b16 %v42
    %v91 = vunpack.c.h.b16 %v42
    %v92 = vunpack.c.l.b16 %v43
    %v93 = vunpack.c.h.b16 %v43
    %v94 = vunpack.c.l.b16 %v44
    %v95 = vunpack.c.h.b16 %v44
    %v96 = vunpack.c.l.b16 %v45
    %v97 = vunpack.c.h.b16 %v45
    %v98 = vunpack.c.l.b16 %v46
    %v99 = vunpack.c.h.b16 %v46
    %v100 = vunpack.c.l.b16 %v47
    %v101 = vunpack.c.h.b16 %v47
    %v102 = vpack.c.b16 %v72, %v70
    %v103 = vpack.c.b16 %v73, %v71
    %v104 = vpack.c.b16 %v76, %v74
    %v105 = vpack.c.b16 %v77, %v75
    %v106 = vpack.c.b16 %v80, %v78
    %v107 = vpack.c.b16 %v81, %v79
    %v108 = vpack.c.b16 %v84, %v82
    %v109 = vpack.c.b16 %v85, %v83
    %v110 = vpack.c.b16 %v88, %v86
    %v111 = vpack.c.b16 %v89, %v87
    %v112 = vpack.c.b16 %v92, %v90
    %v113 = vpack.c.b16 %v93, %v91
    %v114 = vpack.c.b16 %v96, %v94
    %v115 = vpack.c.b16 %v97, %v95
    %v116 = vpack.c.b16 %v100, %v98
    %v117 = vpack.c.b16 %v101, %v99
    %134 = vmatprep.subr.bf16.mxu0 %v103
    %135 = vmatpush1.bf16.msra.mxu0 %v102
    %136 = vmatprep.subr.bf16.mxu0 %v105
    %137 = vmatpush1.bf16.msra.mxu0 %v104
    %138 = vmatprep.subr.bf16.mxu0 %v107
    %139 = vmatpush1.bf16.msra.mxu0 %v106
    %140 = vmatprep.subr.bf16.mxu0 %v109
    %141 = vmatpush1.bf16.msra.mxu0 %v108
    %142 = vmatprep.subr.bf16.mxu0 %v111
    %143 = vmatpush1.bf16.msra.mxu0 %v110
    %144 = vmatprep.subr.bf16.mxu0 %v113
    %145 = vmatpush1.bf16.msra.mxu0 %v112
    %146 = vmatprep.subr.bf16.mxu0 %v115
    %147 = vmatpush1.bf16.msra.mxu0 %v114
    %148 = vmatprep.subr.bf16.mxu0 %v117
    %149 = vmatpush1.bf16.msra.mxu0 %v116
    %150 = vmatprep.subr.bf16.mxu0 0
    %151 = vmatpush1.bf16.msra.mxu0 0
    %152 = vmatprep.subr.bf16.mxu0 0
    %153 = vmatpush1.bf16.msra.mxu0 0
    %154 = vmatprep.subr.bf16.mxu0 0
    %155 = vmatpush1.bf16.msra.mxu0 0
    %156 = vmatprep.subr.bf16.mxu0 0
    %157 = vmatpush1.bf16.msra.mxu0 0
    %158 = vmatprep.subr.bf16.mxu0 0
    %159 = vmatpush1.bf16.msra.mxu0 0
    %160 = vmatprep.subr.bf16.mxu0 0
    %161 = vmatpush1.bf16.msra.mxu0 0
    %162 = vmatprep.subr.bf16.mxu0 0
    %163 = vmatpush1.bf16.msra.mxu0 0
    %164 = vmatprep.subr.bf16.mxu0 0
    %165 = vmatpush1.bf16.msra.mxu0 0
    %166 = vmatprep.mubr.bf16.mxu0 0
    %167 = vmatmul.mubr.bf16.gmra.mrb[0].mxu0 %v52
    %v168 = vpop.f32.mrb[0].mxu0
    %v169 = vadd.f32 0.0, %v168
    %v170 = vpop.f32.mrb[0].mxu0
    %v171 = vadd.f32 0.0, %v170
    %v172 = vpop.f32.mrb[0].mxu0
    %v173 = vadd.f32 0.0, %v172
    %v174 = vpop.f32.mrb[0].mxu0
    %v175 = vadd.f32 0.0, %v174
    %176 = vdwg.mxu0
    %v177 = vmax.f32 %v169, %v171
    %178 = vmax.xlane.f32.xlu0 %v177
    %v179 = vpop.xlane.xlu0 %178
    %v180 = vmax.f32 %v173, %v175
    %181 = vmax.xlane.f32.xlu0 %v180
    %v182 = vpop.xlane.xlu0 %181
    %v183 = vsub.f32 %v169, %v179
    %v184 = vsub.f32 %v171, %v179
    %v185 = vsub.f32 %v173, %v182
    %v186 = vsub.f32 %v175, %v182
    %v187 = vmul.f32 %v183, 1.442695
    %v188 = vpow.pop %v187
    %v189 = vmul.f32 %v184, 1.442695
    %v190 = vpow.pop %v189
    %v191 = vmul.f32 %v185, 1.442695
    %v192 = vpow.pop %v191
    %v193 = vmul.f32 %v186, 1.442695
    %v194 = vpow.pop %v193
    %v195 = vadd.f32 %v188, %v190
    %196 = vadd.xlane.f32.xlu0 %v195
    %v197 = vpop.xlane.xlu0 %196
    %v198 = vadd.f32 %v192, %v194
    %199 = vadd.xlane.f32.xlu0 %v198
    %v200 = vpop.xlane.xlu0 %199
    %v201 = vlog2.pop %v197
    %v202 = vmul.f32 %v201, 0.6931472
    %v203 = vlog2.pop %v200
    %v204 = vmul.f32 %v203, 0.6931472
    %v205 = vlaneseq
    %v206 = vand.u32 %v205, 127
    %v207 = vadd.s32 %v206, 128
    %v208 = vld [vmem:[%s2] sm:$0xff]
    %v209 = vld [vmem:[%s2 + $0x8] sm:$0xff]
    %210 = vset.pattern.permute.xlu0 0
    %211 = vperm.xlu0 %210, %v208
    %v212 = vpop.permute.xlu0 %211
    %213 = vset.pattern.permute.xlu0 0
    %214 = vperm.xlu0 %213, %v209
    %v215 = vpop.permute.xlu0 %214
    %vm216 = vcmp.eq.s32.totalorder %v206, %v212
    %vm217 = vcmp.eq.s32.totalorder %v207, %v212
    %vm218 = vcmp.eq.s32.totalorder %v206, %v215
    %vm219 = vcmp.eq.s32.totalorder %v207, %v215
    %v220 = vsel %vm216, 1, 0
    %v221 = vsel %vm217, 1, 0
    %v222 = vsel %vm218, 1, 0
    %v223 = vsel %vm219, 1, 0
    %v224 = vcvt.s32.f32 %v220
    %v225 = vcvt.s32.f32 %v221
    %v226 = vcvt.s32.f32 %v222
    %v227 = vcvt.s32.f32 %v223
    %v228 = vmul.f32 %v183, %v224
    %v229 = vmul.f32 %v184, %v225
    %v230 = vmul.f32 %v185, %v226
    %v231 = vmul.f32 %v186, %v227
    %v232 = vadd.f32 %v228, %v229
    %233 = vadd.xlane.f32.xlu0 %v232
    %v234 = vpop.xlane.xlu0 %233
    %v235 = vadd.f32 %v230, %v231
    %236 = vadd.xlane.f32.xlu0 %v235
    %v237 = vpop.xlane.xlu0 %236
    %v238 = vsub.f32 %v234, %v202
    %v239 = vsub.f32 %v237, %v204
    %v240 = vld [vmem:[%s3] sm:$0xff]
    %v241 = vld [vmem:[%s3 + $0x8] sm:$0xff]
    %s242 = sld [smem:[#allocation2]]
    %v243 = vmul.f32 %v238, %v240
    %v244 = vmul.f32 %v239, %v241
    %vm245 = vcmask 7168
    %v246 = vsel %vm245, %v243, 0.0
    %v247 = vsel %vm245, %v244, 0.0
    %v248 = vadd.f32 %v246, %v247
    %249 = vadd.xlane.f32.xlu0 %v248
    %v250 = vpop.xlane.xlu0 %249
    %v251 = vrot.slane %v250, 4
    %v252 = vadd.f32 %v250, %v251
    %v253 = vrot.slane %v252, 2
    %v254 = vadd.f32 %v252, %v253
    %v255 = vrot.slane %v254, 1
    %v256 = vadd.f32 %v254, %v255
    %s257 = vtos %v256
    %s258 = ssub.f32 0.0, %s257
    %s259 = sadd.f32 %s242, %s258
    %s260 = scalar_lea.smem [#allocation2], 0
    %261 = sst [smem:[%s260]] %s259
    %s262 = sld [smem:[#allocation2 + $0x1]]
    %v263 = vsel %vm245, %v240, 0.0
    %v264 = vsel %vm245, %v241, 0.0
    %v265 = vadd.f32 %v263, %v264
    %266 = vadd.xlane.f32.xlu0 %v265
    %v267 = vpop.xlane.xlu0 %266
    %v268 = vrot.slane %v267, 4
    %v269 = vadd.f32 %v267, %v268
    %v270 = vrot.slane %v269, 2
    %v271 = vadd.f32 %v269, %v270
    %v272 = vrot.slane %v271, 1
    %v273 = vadd.f32 %v271, %v272
    %s274 = vtos %v273
    %s275 = sadd.f32 %s262, %s274
    %s276 = scalar_lea.smem [#allocation2], 1
    %277 = sst [smem:[%s276]] %s275
    // Predicated region
    $region22: #{loss_wrapper_forward.1} parent=1 // pred_check
      %p278 = pneg %p22
    $region23: #{loss_wrapper_forward.1} parent=1 // pred_check_branch
      %280 = sbr.rel (%p278) target = $region25
    $region24: #{loss_wrapper_forward.1} parent=1 // pred_region
      %s281 = sld [smem:[#allocation2]]
      %s282 = scalar_lea.smem [#allocation3], 0
      %283 = sst [smem:[%s282]] %s281
      %s284 = sld [smem:[#allocation2 + $0x1]]
      %s285 = scalar_lea.smem [#allocation5], 0
      %286 = sst [smem:[%s285]] %s284
    $region25: #{loss_wrapper_forward.1} parent=1 // pred_fallthru
      _
    // Predicated region
    $region26: #{loss_wrapper_forward.1} parent=1 // pred_check
      _
    $region27: #{loss_wrapper_forward.1} parent=1 // pred_check_branch
      %288 = sbr.rel (0) target = $region29
    $region28: #{loss_wrapper_forward.1} parent=1 // pred_region
      %s290 = ssub.s32 16, 16
      %291 = vsyncadd [#allocation4], %s290
      %294 = dma.smem_to_hbm [#allocation3], 16, %s4, [#allocation4]
    $region29: #{loss_wrapper_forward.1} parent=1 // pred_fallthru
      _
    // Predicated region
    $region30: #{loss_wrapper_forward.1} parent=1 // pred_check
      _
    $region31: #{loss_wrapper_forward.1} parent=1 // pred_check_branch
      %296 = sbr.rel (0) target = $region33
    $region32: #{loss_wrapper_forward.1} parent=1 // pred_region
      %s298 = ssub.s32 16, 16
      %299 = vsyncadd [#allocation6], %s298
      %302 = dma.smem_to_hbm [#allocation5], 16, %s5, [#allocation6]
    $region33: #{loss_wrapper_forward.1} parent=1 // pred_fallthru
      _
    // Predicated region
    $region34: #{loss_wrapper_forward.1} parent=1 // pred_check
      _
    $region35: #{loss_wrapper_forward.1} parent=1 // pred_check_branch
      %304 = sbr.rel (0) target = $region37
    $region36: #{loss_wrapper_forward.1} parent=1 // pred_region
      %305 = dma.done [#allocation4], 16
    $region37: #{loss_wrapper_forward.1} parent=1 // pred_fallthru
      _
    // Predicated region
    $region38: #{loss_wrapper_forward.1} parent=1 // pred_check
      _
    $region39: #{loss_wrapper_forward.1} parent=1 // pred_check_branch
      %307 = sbr.rel (0) target = $region41
    $region40: #{loss_wrapper_forward.1} parent=1 // pred_region
      %308 = dma.done [#allocation6], 16
    $region41: #{loss_wrapper_forward.1} parent=1 // pred_fallthru
      _
    %309 = sfence
    %310 = vsyncpa [#allocation4], 1
    %311 = vsyncpa [#allocation6], 1

</llo_original>
